<compile_context>
chip_gen: v6e
topology: v6e:2x2x1
jax: 0.10.0
libtpu: 0.0.40
codegen_flags: <defaults>
</compile_context>

<pallas_src>
from functools import partial

import jax
import jax.numpy as jnp
from jax.experimental import pallas as pl
from jax.experimental.pallas import tpu as pltpu

PAD = 7  # max spatial padding needed over all branches (3x3 conv, dilation 7)


# --------------------------------------------------------------------------- #
# Pallas kernel: one fused matmul + bias per batch element.
# --------------------------------------------------------------------------- #
def _inception_kernel(p_ref, w_ref, b_ref, o_ref):
    # p_ref: (1, K, HW)   lane-dense im2col patches for one batch element
    # w_ref: (C_OUT, K)   fused block-structured weight
    # b_ref: (C_OUT, 1)   bias (broadcast over the HW lane dim)
    # o_ref: (1, C_OUT, HW)
    acc = jnp.dot(w_ref[...], p_ref[0], preferred_element_type=jnp.float32)
    o_ref[0] = acc + b_ref[...]


# --------------------------------------------------------------------------- #
# Wrapper-side prep: tap enumeration, fused weight, lane-dense im2col.
# (Layout-only work; all FLOPs stay inside the Pallas kernel.)
# --------------------------------------------------------------------------- #
def _branch_taps():
    """Distinct (dr, dc) offsets used by any branch + per-branch tap indices."""
    taps = []
    index = {}

    def tap(dr, dc):
        if (dr, dc) not in index:
            index[(dr, dc)] = len(taps)
            taps.append((dr, dc))
        return index[(dr, dc)]

    per_branch = []
    for b in range(7):                       # dilated 3x3 branches, d = b + 1
        d = b + 1
        per_branch.append([tap((kh - 1) * d, (kw - 1) * d)
                           for kh in range(3) for kw in range(3)])
    per_branch.append([tap(kh - 2, kw - 2)   # 5x5 branch, padding 2
                       for kh in range(5) for kw in range(5)])
    return taps, per_branch


def _fuse_weights(w3, w5, taps, per_branch):
    """Block-structured (c_out, T*c_in) weight; K ordered (tap, c_in)."""
    c_in, cl_out = w3.shape[-2], w3.shape[-1]
    T = len(taps)
    blocks = []
    for b in range(8):
        wb = jnp.zeros((T, c_in, cl_out), jnp.float32)
        idx = jnp.asarray(per_branch[b], dtype=jnp.int32)
        vals = (w3[b].reshape(9, c_in, cl_out) if b < 7
                else w5.reshape(25, c_in, cl_out)).astype(jnp.float32)
        blocks.append(wb.at[idx].set(vals))
    w_full = jnp.concatenate(blocks, axis=-1)          # (T, c_in, c_out)
    return w_full.reshape(T * c_in, 8 * cl_out).T      # (c_out, T*c_in)


def cnn_inception_chess_pallas(x_nchw, w3, w5, bias):
    """x_nchw: (N, c_in, H, W); w3: (7,3,3,c_in,cl_out); w5: (5,5,c_in,cl_out);
    bias: (8*cl_out,). Returns (N, 8*cl_out, H, W) to match the PyTorch module."""
    N, c_in, H, W = x_nchw.shape
    cl_out = w3.shape[-1]
    c_out = 8 * cl_out
    HW = H * W

    taps, per_branch = _branch_taps()
    T = len(taps)
    K = T * c_in

    # Lane-dense im2col: patches[n, t*c_in + ci, h*W + w]
    #   = x_pad[n, ci, PAD + dr_t + h, PAD + dc_t + w]
    x_pad = jnp.pad(x_nchw.astype(jnp.float32),
                    ((0, 0), (0, 0), (PAD, PAD), (PAD, PAD)))
    cols = [x_pad[:, :, PAD + dr:PAD + dr + H, PAD + dc:PAD + dc + W]
            for (dr, dc) in taps]                       # each (N, c_in, H, W)
    patches = jnp.stack(cols, axis=1).reshape(N, K, HW)

    w_fused = _fuse_weights(w3, w5, taps, per_branch)   # (c_out, K)
    bias2 = bias.reshape(c_out, 1).astype(jnp.float32)

    # Pad K up to a multiple of 8 (zero rows -> no effect) for clean tiling.
    K_pad = ((K + 7) // 8) * 8
    if K_pad != K:
        patches = jnp.pad(patches, ((0, 0), (0, K_pad - K), (0, 0)))
        w_fused = jnp.pad(w_fused, ((0, 0), (0, K_pad - K)))

    out = pl.pallas_call(
        _inception_kernel,
        out_shape=jax.ShapeDtypeStruct((N, c_out, HW), jnp.float32),
        grid=(N,),
        in_specs=[
            pl.BlockSpec((1, K_pad, HW), lambda n: (n, 0, 0)),
            pl.BlockSpec((c_out, K_pad), lambda n: (0, 0)),
            pl.BlockSpec((c_out, 1), lambda n: (0, 0)),
        ],
        out_specs=pl.BlockSpec((1, c_out, HW), lambda n: (n, 0, 0)),
        compiler_params=pltpu.CompilerParams(
            dimension_semantics=("parallel",)),
    )(patches, w_fused, bias2)

    # (N, c_out, H*W) -> (N, c_out, H, W): pure reshape, no transpose needed.
    return out.reshape(N, c_out, H, W)


# --------------------------------------------------------------------------- #
# Pure-JAX reference (matches PyTorch Conv2d semantics).
# --------------------------------------------------------------------------- #
def _reference(x_nchw, w3, w5, bias):
    cl_out = w3.shape[-1]
    outs = []
    for i in range(7):
        d = i + 1
        w_oihw = jnp.transpose(w3[i], (3, 2, 0, 1))  # (cl_out, c_in, 3, 3)
        o = jax.lax.conv_general_dilated(
            x_nchw, w_oihw, window_strides=(1, 1),
            padding=((d, d), (d, d)), rhs_dilation=(d, d),
            dimension_numbers=("NCHW", "OIHW", "NCHW"))
        o = o + bias[i * cl_out:(i + 1) * cl_out].reshape(1, -1, 1, 1)
        outs.append(o)
    w_oihw = jnp.transpose(w5, (3, 2, 0, 1))         # (cl_out, c_in, 5, 5)
    o = jax.lax.conv_general_dilated(
        x_nchw, w_oihw, window_strides=(1, 1),
        padding=((2, 2), (2, 2)),
        dimension_numbers=("NCHW", "OIHW", "NCHW"))
    o = o + bias[7 * cl_out:8 * cl_out].reshape(1, -1, 1, 1)
    outs.append(o)
    return jnp.concatenate(outs, axis=1)


if __name__ == "__main__":
    # Small, PyTorch-consistent shapes: N=2, c_in=4, H=W=16, c_out=16 (divisible by 8).
    N, c_in, H, W = 2, 4, 16, 16
    c_out = 16
    cl_out = c_out // 8

    key = jax.random.PRNGKey(0)
    kx, kw3, kw5, kb = jax.random.split(key, 4)

    x = jax.random.normal(kx, (N, c_in, H, W), dtype=jnp.float32)
    w3 = jax.random.normal(kw3, (7, 3, 3, c_in, cl_out), dtype=jnp.float32) * 0.1
    w5 = jax.random.normal(kw5, (5, 5, c_in, cl_out), dtype=jnp.float32) * 0.1
    bias = jax.random.normal(kb, (c_out,), dtype=jnp.float32) * 0.1

    fn = jax.jit(cnn_inception_chess_pallas)
    out = fn(x, w3, w5, bias)
    out = jax.block_until_ready(out)

    ref = _reference(x, w3, w5, bias)
    assert out.shape == (N, c_out, H, W), out.shape
    assert jnp.allclose(out, ref, rtol=1e-4, atol=1e-4), "mismatch vs. reference conv"

    print("KERNEL_OK")
</pallas_src>

<mosaic_0001>
module attributes {stable_mosaic.version = 11 : i64} {
  func.func @_inception_kernel(%arg0: i32, %arg1: memref<1x264x256xf32, #tpu.memory_space<vmem>>, %arg2: memref<16x264xf32, #tpu.memory_space<vmem>>, %arg3: memref<16x1xf32, #tpu.memory_space<vmem>>, %arg4: memref<1x16x256xf32, #tpu.memory_space<vmem>>) attributes {dimension_semantics = [#tpu.dimension_semantics<parallel>], iteration_bounds = array<i64: 2>, scalar_prefetch = 0 : i64, scratch_operands = 0 : i64, tpu.core_type = #tpu.core_type<tc>, window_params = [{transform_indices = @transform_0, window_bounds = array<i64: 1, 264, 256>}, {pipeline_mode = #tpu.pipeline_mode<synchronous>, transform_indices = @transform_1, window_bounds = array<i64: 16, 264>}, {pipeline_mode = #tpu.pipeline_mode<synchronous>, transform_indices = @transform_2, window_bounds = array<i64: 16, 1>}, {transform_indices = @transform_3, window_bounds = array<i64: 1, 16, 256>}]} {
    %c0 = arith.constant 0 : index
    %c0_0 = arith.constant 0 : index
    %0 = vector.load %arg2[%c0, %c0_0] : memref<16x264xf32, #tpu.memory_space<vmem>>, vector<16x264xf32>
    %c0_1 = arith.constant 0 : index
    %c0_2 = arith.constant 0 : index
    %c0_3 = arith.constant 0 : index
    %1 = vector.load %arg1[%c0_1, %c0_2, %c0_3] : memref<1x264x256xf32, #tpu.memory_space<vmem>>, vector<1x264x256xf32>
    %2 = vector.shape_cast %1 : vector<1x264x256xf32> to vector<264x256xf32>
    %cst = arith.constant dense<0.000000e+00> : vector<16x256xf32>
    %3 = tpu.matmul %0, %2, %cst {dimension_numbers = #tpu.dot_dimension_numbers<[1], [0], [0], [1], [0, 0, 1, 1], [], []>} : vector<16x264xf32>, vector<264x256xf32>, vector<16x256xf32> -> vector<16x256xf32>
    %c0_4 = arith.constant 0 : index
    %c0_5 = arith.constant 0 : index
    %4 = vector.load %arg3[%c0_4, %c0_5] : memref<16x1xf32, #tpu.memory_space<vmem>>, vector<16x1xf32>
    %5 = vector.broadcast %4 : vector<16x1xf32> to vector<16x256xf32>
    %6 = arith.addf %3, %5 : vector<16x256xf32>
    %c0_6 = arith.constant 0 : index
    %c0_7 = arith.constant 0 : index
    %c0_8 = arith.constant 0 : index
    %7 = vector.load %arg4[%c0_6, %c0_7, %c0_8] : memref<1x16x256xf32, #tpu.memory_space<vmem>>, vector<1x16x256xf32>
    %8 = vector.shape_cast %7 : vector<1x16x256xf32> to vector<16x256xf32>
    %9 = vector.shape_cast %6 : vector<16x256xf32> to vector<1x16x256xf32>
    tpu.vector_store %arg4[%c0_6, %c0_7, %c0_8], %9 {strides = array<i32>} : memref<1x16x256xf32, #tpu.memory_space<vmem>>, vector<1x16x256xf32>,
    return
  }
  func.func @transform_0(%arg0: i32) -> (i32, i32, i32) {
    %c0_i32 = arith.constant 0 : i32
    %c0_i32_0 = arith.constant 0 : i32
    %c0_i32_1 = arith.constant 0 : i32
    return %arg0, %c0_i32, %c0_i32_0 : i32, i32, i32
  }
  func.func @transform_1(%arg0: i32) -> (i32, i32) {
    %c0_i32 = arith.constant 0 : i32
    %c0_i32_0 = arith.constant 0 : i32
    %c0_i32_1 = arith.constant 0 : i32
    return %c0_i32, %c0_i32_0 : i32, i32
  }
  func.func @transform_2(%arg0: i32) -> (i32, i32) {
    %c0_i32 = arith.constant 0 : i32
    %c0_i32_0 = arith.constant 0 : i32
    %c0_i32_1 = arith.constant 0 : i32
    return %c0_i32, %c0_i32_0 : i32, i32
  }
  func.func @transform_3(%arg0: i32) -> (i32, i32, i32) {
    %c0_i32 = arith.constant 0 : i32
    %c0_i32_0 = arith.constant 0 : i32
    %c0_i32_1 = arith.constant 0 : i32
    return %arg0, %c0_i32, %c0_i32_0 : i32, i32, i32
  }
}

</mosaic_0001>

<llo_original>
// kernel: cnn_inception_chess_pallas.1
$region0: #{cnn_inception_chess_pallas.1}
  #allocation0 [shape = 'u32[]', space=smem, size = 0x4, offset = 0x4, fixed_abs, tag = 'smem constant byte address 0x4 - core index']
  #allocation1 [shape = 'u32[144,128]{1,0:T(1,128)}', space=vmem, size = 0x12000, scoped, tag = 'internal scratch']
  %s0 = inlined_call_operand.vmem [shape: f32[2,264,256], index: 0, kind: input, shape index: {}]
  %s1 = inlined_call_operand.vmem [shape: f32[16,264], index: 1, kind: input, shape index: {}]
  %s2 = inlined_call_operand.vmem [shape: f32[16,1], index: 2, kind: input, shape index: {}]
  %s3 = inlined_call_operand.vmem [shape: f32[2,16,256], index: 3, kind: output, shape index: {}]
  %s4 = sld [smem:[#allocation0]]
  $region45: #{cnn_inception_chess_pallas.1} parent=0
    _
  %s6 = ssub.s32 1, %s4
  %s7 = scalar_select 0, %s6, %s4
  loop: start=0, step=1, limit=4
  $region2: #{cnn_inception_chess_pallas.1} parent=0 // loop_pre_header
    _
  $region3: #{cnn_inception_chess_pallas.1} parent=0 // loop_header
    %s9 = sphi 0, %s13
    %p10 = scmp.ge.s32.totalorder %s9, 4
    %s19 = sphi 0, %s21
    %s22 = sphi 0, %s19
    %s23 = sphi 0, %s22
    %s39 = sphi 0, %s23
    %s43 = sphi 0, %s43
    %s45 = sphi 0, %s43
    %s46 = sphi 0, %s45
    %s60 = sphi 0, %s46
    %s64 = sphi 0, %s64
    %s66 = sphi 0, %s64
    %s67 = sphi 0, %s66
    %s81 = sphi 0, %s67
    %s87 = sphi 0, %s89
    %s90 = sphi 0, %s87
    %s91 = sphi 0, %s90
    %s107 = sphi 0, %s91
  $region4: #{cnn_inception_chess_pallas.1} parent=0 // loop_header_branch
    %12 = sbr.rel (%p10) target = $region8
  $region5: #{cnn_inception_chess_pallas.1} parent=0 // loop_body
    %s14 = ssub.s32 %s9, 1
    %s15 = ssub.s32 %s9, 2
    %s16 = sadd.s32 %s9, 1
    %s17 = ssub.s32 %s9, %s16
    %p18 = scmp.eq.s32.totalorder %s17, 0
    %s20 = sadd.s32 %s19, 1
    %s21 = scalar_select %p18, %s19, %s20
    %p24 = pneg %p18
    %p25 = scmp.eq.s32.totalorder %s9, 1
    %p26 = por %p24, %p25
    %p27 = scmp.ne.s32.totalorder %s19, %s22
    %p28 = scmp.eq.s32.totalorder %s9, 0
    %p29 = por %p27, %p28
    %p30 = scmp.ne.s32.totalorder %s19, %s22
    %p31 = scmp.eq.s32.totalorder %s14, 1
    %p32 = por %p30, %p31
    %p33 = scmp.ne.s32.totalorder %s22, %s23
    %p34 = scmp.eq.s32.totalorder %s14, 0
    %p35 = por %p33, %p34
    %p36 = scmp.ne.s32.totalorder %s22, %s23
    %p37 = scmp.eq.s32.totalorder %s15, 1
    %p38 = por %p36, %p37
    %p40 = scmp.ne.s32.totalorder %s23, %s39
    %p41 = scmp.eq.s32.totalorder %s15, 0
    %p42 = por %p40, %p41
    %s44 = sadd.s32 %s43, 1
    %p47 = scmp.eq.s32.totalorder %s9, 1
    %p48 = scmp.ne.s32.totalorder %s43, %s45
    %p49 = scmp.eq.s32.totalorder %s9, 0
    %p50 = por %p48, %p49
    %p51 = scmp.ne.s32.totalorder %s43, %s45
    %p52 = scmp.eq.s32.totalorder %s14, 1
    %p53 = por %p51, %p52
    %p54 = scmp.ne.s32.totalorder %s45, %s46
    %p55 = scmp.eq.s32.totalorder %s14, 0
    %p56 = por %p54, %p55
    %p57 = scmp.ne.s32.totalorder %s45, %s46
    %p58 = scmp.eq.s32.totalorder %s15, 1
    %p59 = por %p57, %p58
    %p61 = scmp.ne.s32.totalorder %s46, %s60
    %p62 = scmp.eq.s32.totalorder %s15, 0
    %p63 = por %p61, %p62
    %s65 = sadd.s32 %s64, 1
    %p68 = scmp.eq.s32.totalorder %s9, 1
    %p69 = scmp.ne.s32.totalorder %s64, %s66
    %p70 = scmp.eq.s32.totalorder %s9, 0
    %p71 = por %p69, %p70
    %p72 = scmp.ne.s32.totalorder %s64, %s66
    %p73 = scmp.eq.s32.totalorder %s14, 1
    %p74 = por %p72, %p73
    %p75 = scmp.ne.s32.totalorder %s66, %s67
    %p76 = scmp.eq.s32.totalorder %s14, 0
    %p77 = por %p75, %p76
    %p78 = scmp.ne.s32.totalorder %s66, %s67
    %p79 = scmp.eq.s32.totalorder %s15, 1
    %p80 = por %p78, %p79
    %p82 = scmp.ne.s32.totalorder %s67, %s81
    %p83 = scmp.eq.s32.totalorder %s15, 0
    %p84 = por %p82, %p83
    %s85 = ssub.s32 %s9, %s16
    %p86 = scmp.eq.s32.totalorder %s85, 0
    %s88 = sadd.s32 %s87, 1
    %s89 = scalar_select %p86, %s87, %s88
    %p92 = pneg %p86
    %p93 = scmp.eq.s32.totalorder %s9, 1
    %p94 = por %p92, %p93
    %p95 = scmp.ne.s32.totalorder %s87, %s90
    %p96 = scmp.eq.s32.totalorder %s9, 0
    %p97 = por %p95, %p96
    %p98 = scmp.ne.s32.totalorder %s87, %s90
    %p99 = scmp.eq.s32.totalorder %s14, 1
    %p100 = por %p98, %p99
    %p101 = scmp.ne.s32.totalorder %s90, %s91
    %p102 = scmp.eq.s32.totalorder %s14, 0
    %p103 = por %p101, %p102
    %p104 = scmp.ne.s32.totalorder %s90, %s91
    %p105 = scmp.eq.s32.totalorder %s15, 1
    %p106 = por %p104, %p105
    %p108 = scmp.ne.s32.totalorder %s91, %s107
    %p109 = scmp.eq.s32.totalorder %s15, 0
    %p110 = por %p108, %p109
    %p111 = scmp.le.s32.totalorder 1, %s9
    %p112 = scmp.lt.s32.totalorder %s9, 3
    %p113 = pnand %p111, %p112
    %p114 = pneg %p113
    // Predicated region
    $region9: #{cnn_inception_chess_pallas.1} parent=5 // pred_check
      _
    $region10: #{cnn_inception_chess_pallas.1} parent=5 // pred_check_branch
      %116 = sbr.rel (%p113) target = $region12
    $region11: #{cnn_inception_chess_pallas.1} parent=5 // pred_region
      %s117 = ssub.s32 %s9, 1
      // Predicated region
      $region13: #{cnn_inception_chess_pallas.1} parent=11 // pred_check
        %p118 = pneg %p56
      $region14: #{cnn_inception_chess_pallas.1} parent=11 // pred_check_branch
        %120 = sbr.rel (%p118) target = $region16
      $region15: #{cnn_inception_chess_pallas.1} parent=11 // pred_region
        _
      $region16: #{cnn_inception_chess_pallas.1} parent=11 // pred_fallthru
        _
      // Predicated region
      $region17: #{cnn_inception_chess_pallas.1} parent=11 // pred_check
        %p121 = pneg %p77
      $region18: #{cnn_inception_chess_pallas.1} parent=11 // pred_check_branch
        %123 = sbr.rel (%p121) target = $region20
      $region19: #{cnn_inception_chess_pallas.1} parent=11 // pred_region
        _
      $region20: #{cnn_inception_chess_pallas.1} parent=11 // pred_fallthru
        _
    $region12: #{cnn_inception_chess_pallas.1} parent=5 // pred_fallthru
      _
    %p124 = scmp.lt.s32.totalorder %s9, 2
    // Predicated region
    $region21: #{cnn_inception_chess_pallas.1} parent=5 // pred_check
      %p125 = pneg %p124
    $region22: #{cnn_inception_chess_pallas.1} parent=5 // pred_check_branch
      %127 = sbr.rel (%p125) target = $region24
    $region23: #{cnn_inception_chess_pallas.1} parent=5 // pred_region
      // Predicated region
      $region25: #{cnn_inception_chess_pallas.1} parent=23 // pred_check
        %p128 = pneg %p29
      $region26: #{cnn_inception_chess_pallas.1} parent=23 // pred_check_branch
        %130 = sbr.rel (%p128) target = $region28
      $region27: #{cnn_inception_chess_pallas.1} parent=23 // pred_region
        %p131 = scmp.lt.s32.totalorder %s9, 1
        %s132 = scalar_select %p131, %s9, 1
        %s133 = smul.addr %s132, 66
        %s134 = smul.addr %s133, 8
        %s135 = scalar_lea.vmem %s0, %s134
      $region28: #{cnn_inception_chess_pallas.1} parent=23 // pred_fallthru
        _
    $region24: #{cnn_inception_chess_pallas.1} parent=5 // pred_fallthru
      _
    %p136 = scmp.le.s32.totalorder 1, %s9
    %p137 = scmp.lt.s32.totalorder %s9, 3
    %p138 = pnand %p136, %p137
    %p139 = pneg %p138
    // Predicated region
    $region29: #{cnn_inception_chess_pallas.1} parent=5 // pred_check
      _
    $region30: #{cnn_inception_chess_pallas.1} parent=5 // pred_check_branch
      %141 = sbr.rel (%p138) target = $region32
    $region31: #{cnn_inception_chess_pallas.1} parent=5 // pred_region
      %s142 = ssub.s32 %s9, 1
      %p143 = scmp.lt.s32.totalorder %s14, 1
      %s144 = scalar_select %p143, %s14, 1
      %s145 = smul.addr %s144, 66
      %s146 = smul.addr %s145, 8
      %s147 = scalar_lea.vmem %s0, %s146
      %p148 = pneg %p35
      %p149 = pneg %p32
      %p150 = pneg %p56
      %p151 = pneg %p53
      %p152 = pneg %p77
      %p153 = pneg %p74
      %p154 = pneg %p103
      %p155 = pneg %p100
      %p156 = scmp.lt.s32.totalorder %s14, 1
      %s157 = scalar_select %p156, %s14, 1
      %s158 = smul.addr %s157, 4
      %s159 = smul.addr %s158, 8
      %s160 = scalar_lea.vmem %s3, %s159
      %p161 = scmp.lt.s32.totalorder %s14, 1
      %s162 = scalar_select %p161, %s14, 1
      %s163 = smul.addr %s162, 66
      %s164 = smul.addr %s163, 8
      %s165 = scalar_lea.vmem %s0, %s164
      %p166 = scmp.lt.s32.totalorder %s14, 1
      %s167 = scalar_select %p166, %s14, 1
      %s168 = smul.addr %s167, 4
      %s169 = smul.addr %s168, 8
      %s170 = scalar_lea.vmem %s3, %s169
      %v171 = vld [vmem:[%s1] sm:$0xff]
      %v172 = vld [vmem:[%s1 + $0x8] sm:$0xff]
      %v173 = vld [vmem:[%s1 + $0x10] sm:$0xff]
      %v174 = vld [vmem:[%s1 + $0x18] sm:$0xff]
      %v175 = vld [vmem:[%s1 + $0x20] sm:$0xff]
      %v176 = vld [vmem:[%s1 + $0x28] sm:$0xff]
      %v177 = vld [vmem:[%s165] sm:$0xff]
      %v178 = vld [vmem:[%s165 + $0x8] sm:$0xff]
      %v179 = vld [vmem:[%s165 + $0x10] sm:$0xff]
      %v180 = vld [vmem:[%s165 + $0x18] sm:$0xff]
      %v181 = vld [vmem:[%s165 + $0x20] sm:$0xff]
      %v182 = vld [vmem:[%s165 + $0x28] sm:$0xff]
      %v183 = vld [vmem:[%s165 + $0x30] sm:$0xff]
      %v184 = vld [vmem:[%s165 + $0x38] sm:$0xff]
      %v185 = vld [vmem:[%s165 + $0x40] sm:$0xff]
      %v186 = vld [vmem:[%s165 + $0x48] sm:$0xff]
      %v187 = vld [vmem:[%s165 + $0x50] sm:$0xff]
      %v188 = vld [vmem:[%s165 + $0x58] sm:$0xff]
      %v189 = vld [vmem:[%s165 + $0x60] sm:$0xff]
      %v190 = vld [vmem:[%s165 + $0x68] sm:$0xff]
      %v191 = vld [vmem:[%s165 + $0x70] sm:$0xff]
      %v192 = vld [vmem:[%s165 + $0x78] sm:$0xff]
      %v193 = vld [vmem:[%s165 + $0x80] sm:$0xff]
      %v194 = vld [vmem:[%s165 + $0x88] sm:$0xff]
      %v195 = vld [vmem:[%s165 + $0x90] sm:$0xff]
      %v196 = vld [vmem:[%s165 + $0x98] sm:$0xff]
      %v197 = vld [vmem:[%s165 + $0xa0] sm:$0xff]
      %v198 = vld [vmem:[%s165 + $0xa8] sm:$0xff]
      %v199 = vld [vmem:[%s165 + $0xb0] sm:$0xff]
      %v200 = vld [vmem:[%s165 + $0xb8] sm:$0xff]
      %v201 = vld [vmem:[%s165 + $0xc0] sm:$0xff]
      %v202 = vld [vmem:[%s165 + $0xc8] sm:$0xff]
      %v203 = vld [vmem:[%s165 + $0xd0] sm:$0xff]
      %v204 = vld [vmem:[%s165 + $0xd8] sm:$0xff]
      %v205 = vld [vmem:[%s165 + $0xe0] sm:$0xff]
      %v206 = vld [vmem:[%s165 + $0xe8] sm:$0xff]
      %v207 = vld [vmem:[%s165 + $0xf0] sm:$0xff]
      %v208 = vld [vmem:[%s165 + $0xf8] sm:$0xff]
      %v209 = vld [vmem:[%s165 + $0x100] sm:$0xff]
      %v210 = vld [vmem:[%s165 + $0x108] sm:$0xff]
      %v211 = vld [vmem:[%s165 + $0x110] sm:$0xff]
      %v212 = vld [vmem:[%s165 + $0x118] sm:$0xff]
      %v213 = vld [vmem:[%s165 + $0x120] sm:$0xff]
      %v214 = vld [vmem:[%s165 + $0x128] sm:$0xff]
      %v215 = vld [vmem:[%s165 + $0x130] sm:$0xff]
      %v216 = vld [vmem:[%s165 + $0x138] sm:$0xff]
      %v217 = vld [vmem:[%s165 + $0x140] sm:$0xff]
      %v218 = vld [vmem:[%s165 + $0x148] sm:$0xff]
      %v219 = vld [vmem:[%s165 + $0x150] sm:$0xff]
      %v220 = vld [vmem:[%s165 + $0x158] sm:$0xff]
      %v221 = vld [vmem:[%s165 + $0x160] sm:$0xff]
      %v222 = vld [vmem:[%s165 + $0x168] sm:$0xff]
      %v223 = vld [vmem:[%s165 + $0x170] sm:$0xff]
      %v224 = vld [vmem:[%s165 + $0x178] sm:$0xff]
      %v225 = vld [vmem:[%s165 + $0x180] sm:$0xff]
      %v226 = vld [vmem:[%s165 + $0x188] sm:$0xff]
      %v227 = vld [vmem:[%s165 + $0x190] sm:$0xff]
      %v228 = vld [vmem:[%s165 + $0x198] sm:$0xff]
      %v229 = vld [vmem:[%s165 + $0x1a0] sm:$0xff]
      %v230 = vld [vmem:[%s165 + $0x1a8] sm:$0xff]
      %v231 = vld [vmem:[%s165 + $0x1b0] sm:$0xff]
      %v232 = vld [vmem:[%s165 + $0x1b8] sm:$0xff]
      %v233 = vld [vmem:[%s165 + $0x1c0] sm:$0xff]
      %v234 = vld [vmem:[%s165 + $0x1c8] sm:$0xff]
      %v235 = vld [vmem:[%s165 + $0x1d0] sm:$0xff]
      %v236 = vld [vmem:[%s165 + $0x1d8] sm:$0xff]
      %v237 = vld [vmem:[%s165 + $0x1e0] sm:$0xff]
      %v238 = vld [vmem:[%s165 + $0x1e8] sm:$0xff]
      %v239 = vld [vmem:[%s165 + $0x1f0] sm:$0xff]
      %v240 = vld [vmem:[%s165 + $0x1f8] sm:$0xff]
      %v241 = vld [vmem:[%s165 + $0x200] sm:$0xff]
      %v242 = vld [vmem:[%s165 + $0x208] sm:$0xff]
      %v243 = vld [vmem:[%s2] sm:$0xff]
      %v244 = vld [vmem:[%s2 + $0x8] sm:$0xff]
      %246 = vset.pattern.permute.xlu0 0
      %247 = vperm.xlu0 %246, %v243
      %v248 = vpop.permute.xlu0 %247
      %251 = vset.pattern.permute.xlu0 0
      %252 = vperm.xlu0 %251, %v244
      %v253 = vpop.permute.xlu0 %252
      %vm255 = vcmask 64512
      %v257 = vsel %vm255, %v173, 0
      %v260 = vsel %vm255, %v176, 0
      %262 = vmatprep.subr.mxu0 %v208
      %263 = vmatpush1.msra.mxu0 %v207
      %264 = vmatprep.subr.mxu0 %v206
      %265 = vmatpush1.msra.mxu0 %v205
      %266 = vmatprep.subr.mxu0 %v204
      %267 = vmatpush1.msra.mxu0 %v203
      %268 = vmatprep.subr.mxu0 %v202
      %269 = vmatpush1.msra.mxu0 %v201
      %270 = vmatprep.subr.mxu0 %v200
      %271 = vmatpush1.msra.mxu0 %v199
      %272 = vmatprep.subr.mxu0 %v198
      %273 = vmatpush1.msra.mxu0 %v197
      %274 = vmatprep.subr.mxu0 %v196
      %275 = vmatpush1.msra.mxu0 %v195
      %276 = vmatprep.subr.mxu0 %v194
      %277 = vmatpush1.msra.mxu0 %v193
      %278 = vmatprep.subr.mxu0 %v192
      %279 = vmatpush1.msra.mxu0 %v191
      %280 = vmatprep.subr.mxu0 %v190
      %281 = vmatpush1.msra.mxu0 %v189
      %282 = vmatprep.subr.mxu0 %v188
      %283 = vmatpush1.msra.mxu0 %v187
      %284 = vmatprep.subr.mxu0 %v186
      %285 = vmatpush1.msra.mxu0 %v185
      %286 = vmatprep.subr.mxu0 %v184
      %287 = vmatpush1.msra.mxu0 %v183
      %288 = vmatprep.subr.mxu0 %v182
      %289 = vmatpush1.msra.mxu0 %v181
      %290 = vmatprep.subr.mxu0 %v180
      %291 = vmatpush1.msra.mxu0 %v179
      %292 = vmatprep.subr.mxu0 %v178
      %293 = vmatpush1.msra.mxu0 %v177
      %294 = vmatprep.subr.mxu0 %v240
      %295 = vmatpush2.msra.mxu0 %v239
      %296 = vmatprep.subr.mxu0 %v238
      %297 = vmatpush2.msra.mxu0 %v237
      %298 = vmatprep.subr.mxu0 %v236
      %299 = vmatpush2.msra.mxu0 %v235
      %300 = vmatprep.subr.mxu0 %v234
      %301 = vmatpush2.msra.mxu0 %v233
      %302 = vmatprep.subr.mxu0 %v232
      %303 = vmatpush2.msra.mxu0 %v231
      %304 = vmatprep.subr.mxu0 %v230
      %305 = vmatpush2.msra.mxu0 %v229
      %306 = vmatprep.subr.mxu0 %v228
      %307 = vmatpush2.msra.mxu0 %v227
      %308 = vmatprep.subr.mxu0 %v226
      %309 = vmatpush2.msra.mxu0 %v225
      %310 = vmatprep.subr.mxu0 %v224
      %311 = vmatpush2.msra.mxu0 %v223
      %312 = vmatprep.subr.mxu0 %v222
      %313 = vmatpush2.msra.mxu0 %v221
      %314 = vmatprep.subr.mxu0 %v220
      %315 = vmatpush2.msra.mxu0 %v219
      %316 = vmatprep.subr.mxu0 %v218
      %317 = vmatpush2.msra.mxu0 %v217
      %318 = vmatprep.subr.mxu0 %v216
      %319 = vmatpush2.msra.mxu0 %v215
      %320 = vmatprep.subr.mxu0 %v214
      %321 = vmatpush2.msra.mxu0 %v213
      %322 = vmatprep.subr.mxu0 %v212
      %323 = vmatpush2.msra.mxu0 %v211
      %324 = vmatprep.subr.mxu0 %v210
      %325 = vmatpush2.msra.mxu0 %v209
      %326 = vmatprep.mubr.f32.mxu0 %v172
      %327 = vmatmul.mubr.f32.gmra.mxu0 %v171
      %v328 = vpop.f32.mrf.mxu0
      %v329 = vadd.f32 %v248, %v328
      %v330 = vpop.f32.mrf.mxu0
      %v331 = vadd.f32 %v248, %v330
      %332 = vmatprep.mubr.f32.mxu0 %v175
      %333 = vmatmul.mubr.f32.gmra.mxu0 %v174
      %v334 = vpop.f32.mrf.mxu0
      %v335 = vadd.f32 %v253, %v334
      %v336 = vpop.f32.mrf.mxu0
      %v337 = vadd.f32 %v253, %v336
      %338 = vdwg.mxu0
      %339 = vmatprep.subr.mxu0 0.0
      %340 = vmatpush1.msra.mxu0 0.0
      %341 = vmatprep.subr.mxu0 0.0
      %342 = vmatpush1.msra.mxu0 0.0
      %343 = vmatprep.subr.mxu0 0.0
      %344 = vmatpush1.msra.mxu0 0.0
      %345 = vmatprep.subr.mxu0 0.0
      %346 = vmatpush1.msra.mxu0 0.0
      %347 = vmatprep.subr.mxu0 0.0
      %348 = vmatpush1.msra.mxu0 0.0
      %349 = vmatprep.subr.mxu0 0.0
      %350 = vmatpush1.msra.mxu0 0.0
      %351 = vmatprep.subr.mxu0 0.0
      %352 = vmatpush1.msra.mxu0 0.0
      %353 = vmatprep.subr.mxu0 0.0
      %354 = vmatpush1.msra.mxu0 0.0
      %355 = vmatprep.subr.mxu0 0.0
      %356 = vmatpush1.msra.mxu0 0.0
      %357 = vmatprep.subr.mxu0 0.0
      %358 = vmatpush1.msra.mxu0 0.0
      %359 = vmatprep.subr.mxu0 0.0
      %360 = vmatpush1.msra.mxu0 0.0
      %361 = vmatprep.subr.mxu0 0.0
      %362 = vmatpush1.msra.mxu0 0.0
      %363 = vmatprep.subr.mxu0 0.0
      %364 = vmatpush1.msra.mxu0 0.0
      %365 = vmatprep.subr.mxu0 0.0
      %366 = vmatpush1.msra.mxu0 0.0
      %367 = vmatprep.subr.mxu0 0.0
      %368 = vmatpush1.msra.mxu0 0.0
      %369 = vmatprep.subr.mxu0 %v242
      %370 = vmatpush1.msra.mxu0 %v241
      %371 = vmatprep.subr.mxu0 0.0
      %372 = vmatpush2.msra.mxu0 0.0
      %373 = vmatprep.subr.mxu0 0.0
      %374 = vmatpush2.msra.mxu0 0.0
      %375 = vmatprep.subr.mxu0 0.0
      %376 = vmatpush2.msra.mxu0 0.0
      %377 = vmatprep.subr.mxu0 0.0
      %378 = vmatpush2.msra.mxu0 0.0
      %379 = vmatprep.subr.mxu0 0.0
      %380 = vmatpush2.msra.mxu0 0.0
      %381 = vmatprep.subr.mxu0 0.0
      %382 = vmatpush2.msra.mxu0 0.0
      %383 = vmatprep.subr.mxu0 0.0
      %384 = vmatpush2.msra.mxu0 0.0
      %385 = vmatprep.subr.mxu0 0.0
      %386 = vmatpush2.msra.mxu0 0.0
      %387 = vmatprep.subr.mxu0 0.0
      %388 = vmatpush2.msra.mxu0 0.0
      %389 = vmatprep.subr.mxu0 0.0
      %390 = vmatpush2.msra.mxu0 0.0
      %391 = vmatprep.subr.mxu0 0.0
      %392 = vmatpush2.msra.mxu0 0.0
      %393 = vmatprep.subr.mxu0 0.0
      %394 = vmatpush2.msra.mxu0 0.0
      %395 = vmatprep.subr.mxu0 0.0
      %396 = vmatpush2.msra.mxu0 0.0
      %397 = vmatprep.subr.mxu0 0.0
      %398 = vmatpush2.msra.mxu0 0.0
      %399 = vmatprep.subr.mxu0 0.0
      %400 = vmatpush2.msra.mxu0 0.0
      %401 = vmatprep.subr.mxu0 0.0
      %402 = vmatpush2.msra.mxu0 0.0
      %403 = vmatprep.mubr.f32.mxu0 0.0
      %404 = vmatmul.mubr.f32.gmra.mxu0 %v257
      %v405 = vpop.f32.mrf.mxu0
      %v406 = vadd.f32 %v329, %v405
      %v407 = vpop.f32.mrf.mxu0
      %v408 = vadd.f32 %v331, %v407
      %409 = vmatprep.mubr.f32.mxu0 0.0
      %410 = vmatmul.mubr.f32.gmra.mxu0 %v260
      %v411 = vpop.f32.mrf.mxu0
      %v412 = vadd.f32 %v335, %v411
      %v413 = vpop.f32.mrf.mxu0
      %v414 = vadd.f32 %v337, %v413
      %415 = vdwg.mxu0
      %416 = vst [vmem:[%s170] sm:$0xff] %v406
      %417 = vst [vmem:[%s170 + $0x8] sm:$0xff] %v408
      %418 = vst [vmem:[%s170 + $0x10] sm:$0xff] %v412
      %419 = vst [vmem:[%s170 + $0x18] sm:$0xff] %v414
      %p420 = scmp.lt.s32.totalorder %s14, 1
      %s421 = scalar_select %p420, %s14, 1
      %s422 = smul.addr %s421, 4
      %s423 = smul.addr %s422, 8
      %s424 = scalar_lea.vmem %s3, %s423
      // Predicated region
      $region33: #{cnn_inception_chess_pallas.1} parent=31 // pred_check
        %p425 = pneg %p100
      $region34: #{cnn_inception_chess_pallas.1} parent=31 // pred_check_branch
        %427 = sbr.rel (%p425) target = $region36
      $region35: #{cnn_inception_chess_pallas.1} parent=31 // pred_region
        _
      $region36: #{cnn_inception_chess_pallas.1} parent=31 // pred_fallthru
        _
    $region32: #{cnn_inception_chess_pallas.1} parent=5 // pred_fallthru
      _
    %p428 = scmp.le.s32.totalorder 2, %s9
    // Predicated region
    $region37: #{cnn_inception_chess_pallas.1} parent=5 // pred_check
      %p429 = pneg %p428
    $region38: #{cnn_inception_chess_pallas.1} parent=5 // pred_check_branch
      %431 = sbr.rel (%p429) target = $region40
    $region39: #{cnn_inception_chess_pallas.1} parent=5 // pred_region
      %s432 = ssub.s32 %s9, 2
      // Predicated region
      $region41: #{cnn_inception_chess_pallas.1} parent=39 // pred_check
        %p433 = pneg %p106
      $region42: #{cnn_inception_chess_pallas.1} parent=39 // pred_check_branch
        %435 = sbr.rel (%p433) target = $region44
      $region43: #{cnn_inception_chess_pallas.1} parent=39 // pred_region
        %p436 = scmp.lt.s32.totalorder %s15, 1
        %s437 = scalar_select %p436, %s15, 1
        %s438 = smul.addr %s437, 4
        %s439 = smul.addr %s438, 8
        %s440 = scalar_lea.vmem %s3, %s439
      $region44: #{cnn_inception_chess_pallas.1} parent=39 // pred_fallthru
        _
    $region40: #{cnn_inception_chess_pallas.1} parent=5 // pred_fallthru
      _
  $region6: #{cnn_inception_chess_pallas.1} parent=0 // loop_footer
    %s13 = sadd.s32 1, %s9
  $region7: #{cnn_inception_chess_pallas.1} parent=0 // loop_footer_branch
    %8 = sbr.rel target = $region3
  $region8: #{cnn_inception_chess_pallas.1} parent=0 // loop_exit
    _

</llo_original>
